<compile_context>
chip_gen: v7x
topology: tpu7x:2x2x1
jax: 0.10.0
libtpu: 0.0.40
codegen_flags: <defaults>
</compile_context>

<pallas_src>
import functools

import jax
import jax.numpy as jnp
from jax.experimental import pallas as pl
from jax.experimental.pallas import tpu as pltpu


def _generator_kernel(x_ref, w_ref, b_ref, o_ref):
    # logits: (TM, V), accumulated in f32 on the MXU.
    logits = jnp.dot(
        x_ref[...], w_ref[...], preferred_element_type=jnp.float32
    ) + b_ref[...].astype(jnp.float32)

    # Row-wise log-softmax, all in f32.
    m = jnp.max(logits, axis=-1, keepdims=True)
    shifted = logits - m
    lse = jnp.log(jnp.sum(jnp.exp(shifted), axis=-1, keepdims=True))
    o_ref[...] = (shifted - lse).astype(o_ref.dtype)


@functools.partial(jax.jit, static_argnames=("block_rows",))
def generator_forward(x, w_t, b, *, block_rows=8):
    """log_softmax(x @ w_t + b, axis=-1).

    x   : (..., d_model)
    w_t : (d_model, vocab)   -- PyTorch weight (vocab, d_model) transposed
    b   : (1, vocab)         -- PyTorch bias reshaped to 2D
    """
    d_model, vocab = w_t.shape
    lead_shape = x.shape[:-1]
    n = 1
    for s in lead_shape:
        n *= s
    x2 = x.reshape(n, d_model)

    # Pad rows up to a multiple of the row tile (sublane-aligned).
    n_pad = pl.cdiv(n, block_rows) * block_rows
    if n_pad != n:
        x2 = jnp.pad(x2, ((0, n_pad - n), (0, 0)))

    grid = (n_pad // block_rows,)
    out = pl.pallas_call(
        _generator_kernel,
        out_shape=jax.ShapeDtypeStruct((n_pad, vocab), x.dtype),
        grid_spec=pltpu.PrefetchScalarGridSpec(
            num_scalar_prefetch=0,
            grid=grid,
            in_specs=[
                # row tile of activations
                pl.BlockSpec((block_rows, d_model), lambda i: (i, 0)),
                # weights / bias: constant block -> resident in VMEM
                pl.BlockSpec((d_model, vocab), lambda i: (0, 0)),
                pl.BlockSpec((1, vocab), lambda i: (0, 0)),
            ],
            out_specs=pl.BlockSpec((block_rows, vocab), lambda i: (i, 0)),
        ),
        compiler_params=pltpu.CompilerParams(
            dimension_semantics=("parallel",),
        ),
    )(x2, w_t, b)

    if n_pad != n:
        out = out[:n]
    return out.reshape(*lead_shape, vocab)


def init_params(key, d_model, vocab_size, dtype=jnp.float32):
    """Matches torch.nn.Linear(d_model, vocab_size) parameter shapes/init."""
    kw, kb = jax.random.split(key)
    bound = 1.0 / jnp.sqrt(d_model)
    # PyTorch: weight (vocab, d_model), bias (vocab,)
    w = jax.random.uniform(kw, (vocab_size, d_model), dtype, -bound, bound)
    b = jax.random.uniform(kb, (vocab_size,), dtype, -bound, bound)
    # Kernel layout: pre-transposed weight, 2D bias.
    return w.T, b.reshape(1, vocab_size)


def reference_generator(x, w_t, b):
    """Pure-JAX reference: log_softmax(Linear(x))."""
    logits = x @ w_t + b.reshape(-1)
    return jax.nn.log_softmax(logits, axis=-1)


if __name__ == "__main__":
    batch = 2
    seq = 8
    d_model = 32
    vocab_size = 256

    key = jax.random.PRNGKey(0)
    kx, kp = jax.random.split(key)

    x = jax.random.normal(kx, (batch, seq, d_model), jnp.float32)
    w_t, b = init_params(kp, d_model, vocab_size)

    out = generator_forward(x, w_t, b)
    jax.block_until_ready(out)

    ref = reference_generator(x, w_t, b)
    assert out.shape == (batch, seq, vocab_size), f"bad shape {out.shape}"
    assert jnp.allclose(out, ref, atol=1e-5, rtol=1e-5), "log_softmax mismatch"
    # Sanity: each row is a valid log-distribution.
    assert jnp.allclose(jnp.sum(jnp.exp(out), axis=-1), 1.0, atol=1e-4)

    print("KERNEL_OK")
</pallas_src>

<mosaic_0001>
module attributes {stable_mosaic.version = 11 : i64} {
  func.func @_generator_kernel(%arg0: i32, %arg1: memref<8x32xf32, #tpu.memory_space<vmem>>, %arg2: memref<32x256xf32, #tpu.memory_space<vmem>>, %arg3: memref<1x256xf32, #tpu.memory_space<vmem>>, %arg4: memref<8x256xf32, #tpu.memory_space<vmem>>) attributes {dimension_semantics = [#tpu.dimension_semantics<parallel>], iteration_bounds = array<i64: 2>, scalar_prefetch = 0 : i64, scratch_operands = 0 : i64, tpu.core_type = #tpu.core_type<tc>, window_params = [{transform_indices = @transform_0, window_bounds = array<i64: 8, 32>}, {pipeline_mode = #tpu.pipeline_mode<synchronous>, transform_indices = @transform_1, window_bounds = array<i64: 32, 256>}, {pipeline_mode = #tpu.pipeline_mode<synchronous>, transform_indices = @transform_2, window_bounds = array<i64: 1, 256>}, {transform_indices = @transform_3, window_bounds = array<i64: 8, 256>}]} {
    %c0 = arith.constant 0 : index
    %c0_0 = arith.constant 0 : index
    %0 = vector.load %arg1[%c0, %c0_0] : memref<8x32xf32, #tpu.memory_space<vmem>>, vector<8x32xf32>
    %c0_1 = arith.constant 0 : index
    %c0_2 = arith.constant 0 : index
    %1 = vector.load %arg2[%c0_1, %c0_2] : memref<32x256xf32, #tpu.memory_space<vmem>>, vector<32x256xf32>
    %cst = arith.constant dense<0.000000e+00> : vector<8x256xf32>
    %2 = tpu.matmul %0, %1, %cst {dimension_numbers = #tpu.dot_dimension_numbers<[1], [0], [0], [1], [0, 0, 1, 1], [], []>} : vector<8x32xf32>, vector<32x256xf32>, vector<8x256xf32> -> vector<8x256xf32>
    %c0_3 = arith.constant 0 : index
    %c0_4 = arith.constant 0 : index
    %3 = vector.load %arg3[%c0_3, %c0_4] : memref<1x256xf32, #tpu.memory_space<vmem>>, vector<1x256xf32>
    %4 = vector.broadcast %3 : vector<1x256xf32> to vector<8x256xf32>
    %5 = arith.addf %2, %4 : vector<8x256xf32>
    %cst_5 = arith.constant dense<0xFF800000> : vector<8xf32>
    %6 = vector.multi_reduction <maximumf>, %5, %cst_5 [1] : vector<8x256xf32> to vector<8xf32>
    %7 = vector.shape_cast %6 : vector<8xf32> to vector<8x1xf32>
    %8 = vector.broadcast %7 : vector<8x1xf32> to vector<8x256xf32>
    %9 = arith.subf %5, %8 : vector<8x256xf32>
    %10 = math.exp %9 : vector<8x256xf32>
    %cst_6 = arith.constant dense<0.000000e+00> : vector<8xf32>
    %11 = vector.multi_reduction <add>, %10, %cst_6 [1] : vector<8x256xf32> to vector<8xf32>
    %12 = vector.shape_cast %11 : vector<8xf32> to vector<8x1xf32>
    %13 = math.log %12 : vector<8x1xf32>
    %14 = vector.broadcast %13 : vector<8x1xf32> to vector<8x256xf32>
    %15 = arith.subf %9, %14 : vector<8x256xf32>
    %c0_7 = arith.constant 0 : index
    %c0_8 = arith.constant 0 : index
    %16 = vector.load %arg4[%c0_7, %c0_8] : memref<8x256xf32, #tpu.memory_space<vmem>>, vector<8x256xf32>
    tpu.vector_store %arg4[%c0_7, %c0_8], %15 {strides = array<i32>} : memref<8x256xf32, #tpu.memory_space<vmem>>, vector<8x256xf32>,
    return
  }
  func.func @transform_0(%arg0: i32) -> (i32, i32) {
    %c0_i32 = arith.constant 0 : i32
    %c0_i32_0 = arith.constant 0 : i32
    return %arg0, %c0_i32 : i32, i32
  }
  func.func @transform_1(%arg0: i32) -> (i32, i32) {
    %c0_i32 = arith.constant 0 : i32
    %c0_i32_0 = arith.constant 0 : i32
    %c0_i32_1 = arith.constant 0 : i32
    return %c0_i32, %c0_i32_0 : i32, i32
  }
  func.func @transform_2(%arg0: i32) -> (i32, i32) {
    %c0_i32 = arith.constant 0 : i32
    %c0_i32_0 = arith.constant 0 : i32
    %c0_i32_1 = arith.constant 0 : i32
    return %c0_i32, %c0_i32_0 : i32, i32
  }
  func.func @transform_3(%arg0: i32) -> (i32, i32) {
    %c0_i32 = arith.constant 0 : i32
    %c0_i32_0 = arith.constant 0 : i32
    return %arg0, %c0_i32 : i32, i32
  }
}

</mosaic_0001>

<llo_original>
// kernel: generator_forward.1
$region0: #{generator_forward.1}
  #allocation0 [shape = 'u32[]', space=smem, size = 0x4, offset = 0x4, fixed_abs, tag = 'smem constant byte address 0x4 - core index']
  #allocation1 [shape = 'u32[144,128]{1,0:T(1,128)}', space=vmem, size = 0x12000, scoped, tag = 'internal scratch']
  %s0 = inlined_call_operand.hbm [shape: f32[16,32], index: 0, kind: input, shape index: {}]
  %s1 = inlined_call_operand.hbm [shape: f32[32,256], index: 1, kind: input, shape index: {}]
  %s2 = inlined_call_operand.vmem [shape: f32[1,256], index: 2, kind: input, shape index: {}]
  %s3 = inlined_call_operand.hbm [shape: f32[16,256], index: 3, kind: output, shape index: {}]
  %s4 = sld [smem:[#allocation0]]
  $region53: #{generator_forward.1} parent=0
    _
  %s6 = ssub.s32 1, %s4
  %s7 = scalar_select 0, %s6, %s4
  $region1: #{generator_forward.1} parent=0
    #allocation2 [shape = 'u8[8192]{0}', space=vmem, size = 0x2000, scoped, tag = 'input window, operand 0']
    #allocation3 [shape = 's32[2]{0}', space=sflag, size = 0x8, scoped, tag = 'scoped memory for generator_forward.1']
    #allocation4 [shape = 's32[2]{0}', space=sflag, size = 0x8, scoped, tag = 'scoped memory for generator_forward.1']
    #allocation5 [shape = 'u8[32768]{0}', space=vmem, size = 0x8000, scoped, tag = 'input window, operand 1, single buffered']
    #allocation6 [shape = 's32[1]{0}', space=sflag, size = 0x4, scoped, tag = 'scoped memory for generator_forward.1']
    #allocation7 [shape = 'u8[16384]{0}', space=vmem, size = 0x4000, scoped, tag = 'output window, operand 0']
    %8 = vsyncpa [#allocation3], 0
    %s9 = scalar_lea.sflag [#allocation3], 1
    %10 = vsyncpa %s9, 0
    %11 = vsyncpa [#allocation6], 0
    %12 = vsyncpa [#allocation4], 0
    %s13 = scalar_lea.sflag [#allocation4], 1
    %14 = vsyncpa %s13, 0
    loop: start=0, step=1, limit=4
    $region2: #{generator_forward.1} parent=1 // loop_pre_header
      _
    $region3: #{generator_forward.1} parent=1 // loop_header
      %s16 = sphi 0, %s20
      %p17 = scmp.ge.s32.totalorder %s16, 4
      %s26 = sphi 0, %s28
      %s29 = sphi 0, %s26
      %s30 = sphi 0, %s29
      %s46 = sphi 0, %s30
      %s50 = sphi 0, %s50
      %s52 = sphi 0, %s50
      %s53 = sphi 0, %s52
      %s67 = sphi 0, %s53
      %s71 = sphi 0, %s71
      %s73 = sphi 0, %s71
      %s74 = sphi 0, %s73
      %s88 = sphi 0, %s74
      %s94 = sphi 0, %s96
      %s97 = sphi 0, %s94
      %s98 = sphi 0, %s97
      %s114 = sphi 0, %s98
    $region4: #{generator_forward.1} parent=1 // loop_header_branch
      %19 = sbr.rel (%p17) target = $region8
    $region5: #{generator_forward.1} parent=1 // loop_body
      %s21 = ssub.s32 %s16, 1
      %s22 = ssub.s32 %s16, 2
      %s23 = sadd.s32 %s16, 1
      %s24 = ssub.s32 %s16, %s23
      %p25 = scmp.eq.s32.totalorder %s24, 0
      %s27 = sadd.s32 %s26, 1
      %s28 = scalar_select %p25, %s26, %s27
      %p31 = pneg %p25
      %p32 = scmp.eq.s32.totalorder %s16, 1
      %p33 = por %p31, %p32
      %p34 = scmp.ne.s32.totalorder %s26, %s29
      %p35 = scmp.eq.s32.totalorder %s16, 0
      %p36 = por %p34, %p35
      %p37 = scmp.ne.s32.totalorder %s26, %s29
      %p38 = scmp.eq.s32.totalorder %s21, 1
      %p39 = por %p37, %p38
      %p40 = scmp.ne.s32.totalorder %s29, %s30
      %p41 = scmp.eq.s32.totalorder %s21, 0
      %p42 = por %p40, %p41
      %p43 = scmp.ne.s32.totalorder %s29, %s30
      %p44 = scmp.eq.s32.totalorder %s22, 1
      %p45 = por %p43, %p44
      %p47 = scmp.ne.s32.totalorder %s30, %s46
      %p48 = scmp.eq.s32.totalorder %s22, 0
      %p49 = por %p47, %p48
      %s51 = sadd.s32 %s50, 1
      %p54 = scmp.eq.s32.totalorder %s16, 1
      %p55 = scmp.ne.s32.totalorder %s50, %s52
      %p56 = scmp.eq.s32.totalorder %s16, 0
      %p57 = por %p55, %p56
      %p58 = scmp.ne.s32.totalorder %s50, %s52
      %p59 = scmp.eq.s32.totalorder %s21, 1
      %p60 = por %p58, %p59
      %p61 = scmp.ne.s32.totalorder %s52, %s53
      %p62 = scmp.eq.s32.totalorder %s21, 0
      %p63 = por %p61, %p62
      %p64 = scmp.ne.s32.totalorder %s52, %s53
      %p65 = scmp.eq.s32.totalorder %s22, 1
      %p66 = por %p64, %p65
      %p68 = scmp.ne.s32.totalorder %s53, %s67
      %p69 = scmp.eq.s32.totalorder %s22, 0
      %p70 = por %p68, %p69
      %s72 = sadd.s32 %s71, 1
      %p75 = scmp.eq.s32.totalorder %s16, 1
      %p76 = scmp.ne.s32.totalorder %s71, %s73
      %p77 = scmp.eq.s32.totalorder %s16, 0
      %p78 = por %p76, %p77
      %p79 = scmp.ne.s32.totalorder %s71, %s73
      %p80 = scmp.eq.s32.totalorder %s21, 1
      %p81 = por %p79, %p80
      %p82 = scmp.ne.s32.totalorder %s73, %s74
      %p83 = scmp.eq.s32.totalorder %s21, 0
      %p84 = por %p82, %p83
      %p85 = scmp.ne.s32.totalorder %s73, %s74
      %p86 = scmp.eq.s32.totalorder %s22, 1
      %p87 = por %p85, %p86
      %p89 = scmp.ne.s32.totalorder %s74, %s88
      %p90 = scmp.eq.s32.totalorder %s22, 0
      %p91 = por %p89, %p90
      %s92 = ssub.s32 %s16, %s23
      %p93 = scmp.eq.s32.totalorder %s92, 0
      %s95 = sadd.s32 %s94, 1
      %s96 = scalar_select %p93, %s94, %s95
      %p99 = pneg %p93
      %p100 = scmp.eq.s32.totalorder %s16, 1
      %p101 = por %p99, %p100
      %p102 = scmp.ne.s32.totalorder %s94, %s97
      %p103 = scmp.eq.s32.totalorder %s16, 0
      %p104 = por %p102, %p103
      %p105 = scmp.ne.s32.totalorder %s94, %s97
      %p106 = scmp.eq.s32.totalorder %s21, 1
      %p107 = por %p105, %p106
      %p108 = scmp.ne.s32.totalorder %s97, %s98
      %p109 = scmp.eq.s32.totalorder %s21, 0
      %p110 = por %p108, %p109
      %p111 = scmp.ne.s32.totalorder %s97, %s98
      %p112 = scmp.eq.s32.totalorder %s22, 1
      %p113 = por %p111, %p112
      %p115 = scmp.ne.s32.totalorder %s98, %s114
      %p116 = scmp.eq.s32.totalorder %s22, 0
      %p117 = por %p115, %p116
      %p118 = scmp.le.s32.totalorder 1, %s16
      %p119 = scmp.lt.s32.totalorder %s16, 3
      %p120 = pnand %p118, %p119
      %p121 = pneg %p120
      // Predicated region
      $region9: #{generator_forward.1} parent=5 // pred_check
        _
      $region10: #{generator_forward.1} parent=5 // pred_check_branch
        %123 = sbr.rel (%p120) target = $region12
      $region11: #{generator_forward.1} parent=5 // pred_region
        %s124 = ssub.s32 %s16, 1
        // Predicated region
        $region13: #{generator_forward.1} parent=11 // pred_check
          %p125 = pneg %p63
        $region14: #{generator_forward.1} parent=11 // pred_check_branch
          %127 = sbr.rel (%p125) target = $region16
        $region15: #{generator_forward.1} parent=11 // pred_region
          %s129 = ssub.s32 1024, 1024
          %130 = vsyncadd [#allocation6], %s129
          %s131 = sshll.u32 [#allocation5], 4
          %s132 = int_to_ptr.vmem [resolvable:$true] %s131
          %137 = dma.hbm_to_vmem [thread:$0]  %s1, 1024, %s132, [#allocation6], 256, 256, 16
        $region16: #{generator_forward.1} parent=11 // pred_fallthru
          _
        // Predicated region
        $region17: #{generator_forward.1} parent=11 // pred_check
          %p138 = pneg %p84
        $region18: #{generator_forward.1} parent=11 // pred_check_branch
          %140 = sbr.rel (%p138) target = $region20
        $region19: #{generator_forward.1} parent=11 // pred_region
          _
        $region20: #{generator_forward.1} parent=11 // pred_fallthru
          _
      $region12: #{generator_forward.1} parent=5 // pred_fallthru
        _
      %p141 = scmp.lt.s32.totalorder %s16, 2
      // Predicated region
      $region21: #{generator_forward.1} parent=5 // pred_check
        %p142 = pneg %p141
      $region22: #{generator_forward.1} parent=5 // pred_check_branch
        %144 = sbr.rel (%p142) target = $region24
      $region23: #{generator_forward.1} parent=5 // pred_region
        // Predicated region
        $region25: #{generator_forward.1} parent=23 // pred_check
          %p145 = pneg %p36
        $region26: #{generator_forward.1} parent=23 // pred_check_branch
          %147 = sbr.rel (%p145) target = $region28
        $region27: #{generator_forward.1} parent=23 // pred_region
          %s148 = sand.u32 %s26, 1
          %s149 = scalar_lea.sflag [#allocation3], %s148
          %s150 = sand.u32 %s26, 1
          %s151 = smul.addr %s150, 8
          %s152 = scalar_lea.vmem [#allocation2], %s151
          %s154 = ssub.s32 128, 128
          %155 = vsyncadd %s149, %s154
          %s156 = smul.addr %s16, 128
          %s157 = scalar_lea.hbm %s0, %s156
          %s159 = sshll.u32 %s152, 4
          %s160 = int_to_ptr.vmem [resolvable:$true] %s159
          %162 = dma.hbm_to_vmem [thread:$0]  %s157, 128, %s160, %s149
        $region28: #{generator_forward.1} parent=23 // pred_fallthru
          _
      $region24: #{generator_forward.1} parent=5 // pred_fallthru
        _
      %p163 = scmp.le.s32.totalorder 1, %s16
      %p164 = scmp.lt.s32.totalorder %s16, 3
      %p165 = pnand %p163, %p164
      %p166 = pneg %p165
      // Predicated region
      $region29: #{generator_forward.1} parent=5 // pred_check
        _
      $region30: #{generator_forward.1} parent=5 // pred_check_branch
        %168 = sbr.rel (%p165) target = $region32
      $region31: #{generator_forward.1} parent=5 // pred_region
        %s169 = ssub.s32 %s16, 1
        %s170 = sand.u32 %s29, 1
        %s171 = scalar_lea.sflag [#allocation3], %s170
        %s172 = sand.u32 %s29, 1
        %s173 = smul.addr %s172, 8
        %s174 = scalar_lea.vmem [#allocation2], %s173
        // Predicated region
        $region33: #{generator_forward.1} parent=31 // pred_check
          %p175 = pneg %p42
        $region34: #{generator_forward.1} parent=31 // pred_check_branch
          %177 = sbr.rel (%p175) target = $region36
        $region35: #{generator_forward.1} parent=31 // pred_region
          %178 = dma.done %s171, 128
        $region36: #{generator_forward.1} parent=31 // pred_fallthru
          _
        // Predicated region
        $region37: #{generator_forward.1} parent=31 // pred_check
          %p179 = pneg %p63
        $region38: #{generator_forward.1} parent=31 // pred_check_branch
          %181 = sbr.rel (%p179) target = $region40
        $region39: #{generator_forward.1} parent=31 // pred_region
          %182 = dma.done [#allocation6], 1024
        $region40: #{generator_forward.1} parent=31 // pred_fallthru
          _
        %s183 = sand.u32 %s29, 1
        %s184 = scalar_lea.sflag [#allocation3], %s183
        %s185 = sand.u32 %s29, 1
        %s186 = smul.addr %s185, 8
        %s187 = scalar_lea.vmem [#allocation2], %s186
        %p188 = pneg %p42
        %p189 = pneg %p39
        %p190 = pneg %p63
        %p191 = pneg %p60
        %p192 = pneg %p84
        %p193 = pneg %p81
        %p194 = pneg %p110
        %p195 = pneg %p107
        %s196 = sand.u32 %s97, 1
        %s197 = scalar_lea.sflag [#allocation4], %s196
        %s198 = sand.u32 %s97, 1
        %s199 = smul.addr %s198, 16
        %s200 = scalar_lea.vmem [#allocation7], %s199
        %v201 = vld [vmem:[%s174] sm:$0xff]
        %v202 = vld [vmem:[#allocation5] sm:$0xff]
        %v203 = vld [vmem:[#allocation5 + $0x8] sm:$0xff]
        %v204 = vld [vmem:[#allocation5 + $0x10] sm:$0xff]
        %v205 = vld [vmem:[#allocation5 + $0x18] sm:$0xff]
        %v206 = vld [vmem:[#allocation5 + $0x20] sm:$0xff]
        %v207 = vld [vmem:[#allocation5 + $0x28] sm:$0xff]
        %v208 = vld [vmem:[#allocation5 + $0x30] sm:$0xff]
        %v209 = vld [vmem:[#allocation5 + $0x38] sm:$0xff]
        %v210 = vld [vmem:[%s2] sm:$0x3]
        %v212 = vlaneseq
        %v213 = vshrl.u32 %v212, 7
        %v214 = vsub.s32 0, %v213
        %v215 = vrot.slane %v210, %v214
        %v216 = vlaneseq
        %v217 = vshrl.u32 %v216, 7
        %v218 = vsub.s32 1, %v217
        %v219 = vrot.slane %v210, %v218
        %vm222 = vcmask 261120
        %v224 = vsel %vm222, %v201, 0
        %226 = vmatprep.subr.mxu0 %v203
        %227 = vmatpush1.msra.mxu0 %v202
        %228 = vmatprep.subr.mxu0 %v205
        %229 = vmatpush1.msra.mxu0 %v204
        %230 = vmatprep.subr.mxu0 %v207
        %231 = vmatpush1.msra.mxu0 %v206
        %232 = vmatprep.subr.mxu0 %v209
        %233 = vmatpush1.msra.mxu0 %v208
        %234 = vmatprep.subr.mxu0 0.0
        %235 = vmatpush1.msra.mxu0 0.0
        %236 = vmatprep.subr.mxu0 0.0
        %237 = vmatpush1.msra.mxu0 0.0
        %238 = vmatprep.subr.mxu0 0.0
        %239 = vmatpush1.msra.mxu0 0.0
        %240 = vmatprep.subr.mxu0 0.0
        %241 = vmatpush1.msra.mxu0 0.0
        %242 = vmatprep.subr.mxu0 0.0
        %243 = vmatpush1.msra.mxu0 0.0
        %244 = vmatprep.subr.mxu0 0.0
        %245 = vmatpush1.msra.mxu0 0.0
        %246 = vmatprep.subr.mxu0 0.0
        %247 = vmatpush1.msra.mxu0 0.0
        %248 = vmatprep.subr.mxu0 0.0
        %249 = vmatpush1.msra.mxu0 0.0
        %250 = vmatprep.subr.mxu0 0.0
        %251 = vmatpush1.msra.mxu0 0.0
        %252 = vmatprep.subr.mxu0 0.0
        %253 = vmatpush1.msra.mxu0 0.0
        %254 = vmatprep.subr.mxu0 0.0
        %255 = vmatpush1.msra.mxu0 0.0
        %256 = vmatprep.subr.mxu0 0.0
        %257 = vmatpush1.msra.mxu0 0.0
        %258 = vmatprep.subr.mxu0 0.0
        %259 = vmatpush1.msra.mxu0 0.0
        %260 = vmatprep.subr.mxu0 0.0
        %261 = vmatpush1.msra.mxu0 0.0
        %262 = vmatprep.subr.mxu0 0.0
        %263 = vmatpush1.msra.mxu0 0.0
        %264 = vmatprep.subr.mxu0 0.0
        %265 = vmatpush1.msra.mxu0 0.0
        %266 = vmatprep.subr.mxu0 0.0
        %267 = vmatpush1.msra.mxu0 0.0
        %268 = vmatprep.subr.mxu0 0.0
        %269 = vmatpush1.msra.mxu0 0.0
        %270 = vmatprep.subr.mxu0 0.0
        %271 = vmatpush1.msra.mxu0 0.0
        %272 = vmatprep.subr.mxu0 0.0
        %273 = vmatpush1.msra.mxu0 0.0
        %274 = vmatprep.subr.mxu0 0.0
        %275 = vmatpush1.msra.mxu0 0.0
        %276 = vmatprep.subr.mxu0 0.0
        %277 = vmatpush1.msra.mxu0 0.0
        %278 = vmatprep.subr.mxu0 0.0
        %279 = vmatpush1.msra.mxu0 0.0
        %280 = vmatprep.subr.mxu0 0.0
        %281 = vmatpush1.msra.mxu0 0.0
        %282 = vmatprep.subr.mxu0 0.0
        %283 = vmatpush1.msra.mxu0 0.0
        %284 = vmatprep.subr.mxu0 0.0
        %285 = vmatpush1.msra.mxu0 0.0
        %286 = vmatprep.subr.mxu0 0.0
        %287 = vmatpush1.msra.mxu0 0.0
        %288 = vmatprep.subr.mxu0 0.0
        %289 = vmatpush1.msra.mxu0 0.0
        %290 = vmatprep.mubr.f32.mxu0 0.0
        %291 = vmatmul.mubr.f32.gmra.mrb[0].mxu0 %v224
        %v292 = vpop.f32.mrb[0].mxu0
        %v293 = vadd.f32 %v215, %v292
        %v294 = vpop.f32.mrb[0].mxu0
        %v295 = vadd.f32 %v219, %v294
        %296 = vdwg.mxu0
        %v297 = vmax.f32 %v293, %v295
        %298 = vmax.xlane.f32.xlu0 %v297
        %v299 = vpop.xlane.xlu0 %298
        %v300 = vsub.f32 %v293, %v299
        %v301 = vsub.f32 %v295, %v299
        %v302 = vmul.f32 %v300, 1.442695
        %v303 = vpow.pop %v302
        %v304 = vmul.f32 %v301, 1.442695
        %v305 = vpow.pop %v304
        %v306 = vadd.f32 %v303, %v305
        %307 = vadd.xlane.f32.xlu0 %v306
        %v308 = vpop.xlane.xlu0 %307
        %v309 = vlog2.pop %v308
        %v310 = vmul.f32 %v309, 0.6931472
        %v311 = vsub.f32 %v300, %v310
        %v312 = vsub.f32 %v301, %v310
        %313 = vst [vmem:[%s200] sm:$0xff] %v311
        %314 = vst [vmem:[%s200 + $0x8] sm:$0xff] %v312
        %s315 = sand.u32 %s97, 1
        %s316 = scalar_lea.sflag [#allocation4], %s315
        %s317 = sand.u32 %s97, 1
        %s318 = smul.addr %s317, 16
        %s319 = scalar_lea.vmem [#allocation7], %s318
        // Predicated region
        $region41: #{generator_forward.1} parent=31 // pred_check
          %p320 = pneg %p107
        $region42: #{generator_forward.1} parent=31 // pred_check_branch
          %322 = sbr.rel (%p320) target = $region44
        $region43: #{generator_forward.1} parent=31 // pred_region
          %s324 = ssub.s32 256, 256
          %325 = vsyncadd %s316, %s324
          %s326 = smul.addr %s21, 2
          %s327 = smul.addr %s326, 128
          %s328 = scalar_lea.hbm %s3, %s327
          %s330 = sshll.u32 %s319, 4
          %s331 = int_to_ptr.vmem [resolvable:$true] %s330
          %333 = dma.vmem_to_hbm [thread:$0]  %s331, 256, %s328, %s316
        $region44: #{generator_forward.1} parent=31 // pred_fallthru
          _
      $region32: #{generator_forward.1} parent=5 // pred_fallthru
        _
      %p334 = scmp.le.s32.totalorder 2, %s16
      // Predicated region
      $region45: #{generator_forward.1} parent=5 // pred_check
        %p335 = pneg %p334
      $region46: #{generator_forward.1} parent=5 // pred_check_branch
        %337 = sbr.rel (%p335) target = $region48
      $region47: #{generator_forward.1} parent=5 // pred_region
        %s338 = ssub.s32 %s16, 2
        // Predicated region
        $region49: #{generator_forward.1} parent=47 // pred_check
          %p339 = pneg %p113
        $region50: #{generator_forward.1} parent=47 // pred_check_branch
          %341 = sbr.rel (%p339) target = $region52
        $region51: #{generator_forward.1} parent=47 // pred_region
          %s342 = sand.u32 %s98, 1
          %s343 = scalar_lea.sflag [#allocation4], %s342
          %s344 = sand.u32 %s98, 1
          %s345 = smul.addr %s344, 16
          %s346 = scalar_lea.vmem [#allocation7], %s345
          %347 = dma.done %s343, 256
        $region52: #{generator_forward.1} parent=47 // pred_fallthru
          _
      $region48: #{generator_forward.1} parent=5 // pred_fallthru
        _
    $region6: #{generator_forward.1} parent=1 // loop_footer
      %s20 = sadd.s32 1, %s16
    $region7: #{generator_forward.1} parent=1 // loop_footer_branch
      %15 = sbr.rel target = $region3
    $region8: #{generator_forward.1} parent=1 // loop_exit
      _
    %348 = vsyncpa [#allocation3], 1
    %s349 = scalar_lea.sflag [#allocation3], 1
    %350 = vsyncpa %s349, 1
    %351 = vsyncpa [#allocation6], 1
    %352 = vsyncpa [#allocation4], 1
    %s353 = scalar_lea.sflag [#allocation4], 1
    %354 = vsyncpa %s353, 1

</llo_original>
